<compile_context>
chip_gen: v5e
topology: v5e:2x2
jax: 0.10.0
libtpu: 0.0.40
codegen_flags: <defaults>
</compile_context>

<pallas_src>
import math

import jax
import jax.numpy as jnp
from jax.experimental import pallas as pl
from jax.experimental.pallas import tpu as pltpu


def _round_up(x, m):
    return ((x + m - 1) // m) * m


def _vmem_budget_bytes():
    """Usable per-TensorCore VMEM budget with headroom, capped ~100 MiB."""
    try:
        cap = int(pltpu.get_tpu_info().vmem_capacity_bytes)
        if cap < (16 << 20):
            cap = 64 << 20
    except Exception:
        cap = 64 << 20            # conservative default: assume v7x (64 MiB/TC)
    return min(100 << 20, cap - (8 << 20))


# ----------------------------------------------------------------------------
# Fused kernel:  h = x;  for each layer:  h = relu(h @ W_i + b_i)
# Writes layer-i output to its own out_ref only for the statically requested
# indices (retidx is static Python, so emission is plain Python control flow).
# ----------------------------------------------------------------------------
def _make_fused_kernel(n_run, emit_mask, compute_dtype):
    def kernel(*refs):
        x_ref = refs[0]
        w_refs = refs[1:1 + n_run]
        b_refs = refs[1 + n_run:1 + 2 * n_run]
        out_refs = refs[1 + 2 * n_run:]

        # In-kernel cast to the MXU compute dtype (no wrapper-side HBM pass).
        h = x_ref[...].astype(compute_dtype)
        out_pos = 0
        for li in range(n_run):
            acc = jnp.dot(h, w_refs[li][...],
                          preferred_element_type=jnp.float32)   # MXU, f32 accum
            acc = acc + b_refs[li][...]                          # (1, D) f32 bias (VPU)
            acc = jnp.maximum(acc, 0.0)                          # relu in f32
            if emit_mask[li]:
                out_refs[out_pos][...] = acc.astype(out_refs[out_pos].dtype)
                out_pos += 1
            h = acc.astype(compute_dtype)                        # stays on-chip

    return kernel


# ----------------------------------------------------------------------------
# BaseMultiReturn.forward semantics backed by one fused pallas_call.
# Weights are pre-padded / pre-cast once at construction (cached).
# ----------------------------------------------------------------------------
class BaseMultiReturnPallas:
    def __init__(self, layer_params, retidx=None, *,
                 compute_dtype=jnp.bfloat16, block_rows=512, out_dtype=None):
        self.retidx = list(retidx) if retidx else None
        n_layers = len(layer_params)
        if not self.retidx:
            self.n_run = n_layers                     # run everything, final only
            self.emit_idx = [self.n_run - 1]
        else:
            self.n_run = max(self.retidx) + 1         # early stop after max(retidx)
            self.emit_idx = sorted(set(self.retidx))
        emit_set = set(self.emit_idx)
        self.emit_mask = [i in emit_set for i in range(self.n_run)]
        self.n_emit = len(self.emit_idx)

        self.compute_dtype = jnp.dtype(compute_dtype)
        self.out_dtype = jnp.dtype(out_dtype) if out_dtype is not None else None
        self.block_rows = int(block_rows)

        d = layer_params[0][0].shape[0]
        self.d = d
        self.d_pad = _round_up(d, 128)                # lane-dense feature dim
        dp = self.d_pad

        # Pad + cast ONCE; zero-padded rows/cols + zero bias keep padded lanes 0.
        ws, bs = [], []
        for i in range(self.n_run):
            w, b = layer_params[i]
            if dp != d:
                w = jnp.pad(w, ((0, dp - d), (0, dp - d)))
                b = jnp.pad(b, (0, dp - d))
            ws.append(jnp.asarray(w, self.compute_dtype))
            bs.append(jnp.asarray(b, jnp.float32).reshape(1, dp))
        self.ws = ws
        self.bs = bs

    @staticmethod
    def _choose_tm(n, cap):
        """Batch tile: sublane-aligned, minimal padding waste, modest step count."""
        cap = max(8, (cap // 8) * 8)
        n8 = _round_up(n, 8)
        if n8 <= cap:
            return n8                                  # single tile, zero dead rows
        best_tm, best_cost = 8, None
        overhead_rows = 32                             # ~0.35us/step expressed as rows
        for tm in range(8, cap + 1, 8):
            n_pad = _round_up(n8, tm)
            cost = n_pad + overhead_rows * (n_pad // tm)
            if (best_cost is None or cost < best_cost
                    or (cost == best_cost and tm > best_tm)):
                best_cost, best_tm = cost, tm
        return best_tm

    def __call__(self, x):
        n, d = x.shape
        assert d == self.d, f"expected feature dim {self.d}, got {d}"
        dp = self.d_pad
        cdt = self.compute_dtype
        out_dtype = self.out_dtype if self.out_dtype is not None else x.dtype

        # ---- VMEM budgeting ------------------------------------------------
        budget = _vmem_budget_bytes()
        w_bytes = self.n_run * dp * dp * cdt.itemsize          # Buffered(1): x1
        b_bytes = self.n_run * dp * 4
        static_bytes = w_bytes + b_bytes
        if static_bytes > budget:
            # TODO(synk): K/N-tiled fallback for weights that overflow per-core VMEM.
            raise ValueError("weights exceed per-core VMEM budget; "
                             "K-tiled path not implemented")
        per_row = (2 * dp * x.dtype.itemsize                   # x tile, double-buffered
                   + 2 * self.n_emit * dp * jnp.dtype(out_dtype).itemsize   # out tiles
                   + dp * (4 + cdt.itemsize))                  # f32 acc + compute h
        max_tm = (budget - static_bytes - (2 << 20)) // per_row
        max_tm = max(8, (max_tm // 8) * 8)

        tm = self._choose_tm(n, min(self.block_rows, max_tm))
        n_pad = _round_up(max(n, 1), tm)

        xp = x
        if n_pad != n or dp != d:
            xp = jnp.pad(x, ((0, n_pad - n), (0, dp - d)))     # no dtype cast here

        grid = (n_pad // tm,)

        x_spec = pl.BlockSpec((tm, dp), lambda i: (i, 0))
        # Grid-invariant blocks: single-buffered (no re-fetch, no wasted VMEM).
        w_spec = pl.BlockSpec((dp, dp), lambda i: (0, 0), pipeline_mode=pl.Buffered(1))
        b_spec = pl.BlockSpec((1, dp), lambda i: (0, 0), pipeline_mode=pl.Buffered(1))
        out_spec = pl.BlockSpec((tm, dp), lambda i: (i, 0))

        out_shapes = tuple(jax.ShapeDtypeStruct((n_pad, dp), out_dtype)
                           for _ in range(self.n_emit))

        vmem_limit = int(min(budget,
                             max(32 << 20, static_bytes + tm * per_row + (4 << 20))))

        kernel = _make_fused_kernel(self.n_run, self.emit_mask, cdt)

        outs = pl.pallas_call(
            kernel,
            out_shape=out_shapes,
            grid_spec=pltpu.PrefetchScalarGridSpec(
                num_scalar_prefetch=0,
                grid=grid,
                in_specs=[x_spec] + [w_spec] * self.n_run + [b_spec] * self.n_run,
                out_specs=tuple(out_spec for _ in range(self.n_emit)),
            ),
            compiler_params=pltpu.CompilerParams(
                dimension_semantics=("parallel",),   # batch tiles shard across TCs
                vmem_limit_bytes=vmem_limit,
            ),
        )(xp, *self.ws, *self.bs)

        if not isinstance(outs, (list, tuple)):
            outs = (outs,)
        if n_pad != n or dp != d:
            outs = [o[:n, :d] for o in outs]         # strip padding only if needed
        else:
            outs = list(outs)

        if not self.retidx:
            return outs[0]
        return outs


# ----------------------------------------------------------------------------
# Deterministic params mimicking nn.Linear default init (uniform +-1/sqrt(fan_in))
# ----------------------------------------------------------------------------
def init_layers(key, num_layers, dim, dtype=jnp.float32):
    params = []
    bound = 1.0 / math.sqrt(dim)
    for i in range(num_layers):
        kw, kb = jax.random.split(jax.random.fold_in(key, i))
        w = jax.random.uniform(kw, (dim, dim), dtype, minval=-bound, maxval=bound)
        b = jax.random.uniform(kb, (dim,), dtype, minval=-bound, maxval=bound)
        params.append((w, b))
    return params


# ----------------------------------------------------------------------------
if __name__ == "__main__":
    key = jax.random.PRNGKey(0)
    batch, dim, num_layers = 64, 128, 4              # lane/sublane-aligned shapes

    k_x, k_p, k_x2, k_p2 = jax.random.split(key, 4)
    x = jax.random.normal(k_x, (batch, dim), dtype=jnp.float32)
    params = init_layers(k_p, num_layers, dim)

    # Plain-JAX reference of the same layer stack (true f32 matmuls).
    def ref_forward(x, params, upto):
        ys = []
        for i in range(upto + 1):
            w, b = params[i]
            x = jnp.maximum(
                jnp.dot(x, w, precision=jax.lax.Precision.HIGHEST) + b, 0.0)
            ys.append(x)
        return ys

    ref = ref_forward(x, params, num_layers - 1)

    # Case 1: retidx=None, f32 compute, small block_rows forces a 2-step batch grid.
    mod_f32 = BaseMultiReturnPallas(params, retidx=None,
                                    compute_dtype=jnp.float32, block_rows=32)
    out_final = jax.block_until_ready(mod_f32(x))
    assert out_final.shape == (batch, dim)
    assert jnp.allclose(out_final, ref[3], atol=2e-3, rtol=2e-3)

    # Case 2: retidx=[3, 1] with the bf16 default compute path (f32 accumulation):
    # outputs after layers 1 and 3 in ascending order, one fused kernel.
    mod_bf16 = BaseMultiReturnPallas(params, retidx=[3, 1])
    outs = [jax.block_until_ready(o) for o in mod_bf16(x)]
    assert len(outs) == 2 and all(o.shape == (batch, dim) for o in outs)
    assert jnp.allclose(outs[0], ref[1], atol=1e-1, rtol=1e-1)
    assert jnp.allclose(outs[1], ref[3], atol=1e-1, rtol=1e-1)

    # Case 3: non-aligned shapes exercise padding + de-pad slice (early stop at 1).
    b2, d2 = 10, 96
    x2 = jax.random.normal(k_x2, (b2, d2), dtype=jnp.float32)
    params2 = init_layers(k_p2, 3, d2)
    mod2 = BaseMultiReturnPallas(params2, retidx=[0, 1])
    outs2 = [jax.block_until_ready(o) for o in mod2(x2)]
    ref2 = ref_forward(x2, params2, 1)
    assert all(o.shape == (b2, d2) for o in outs2)
    assert jnp.allclose(outs2[0], ref2[0], atol=1e-1, rtol=1e-1)
    assert jnp.allclose(outs2[1], ref2[1], atol=1e-1, rtol=1e-1)

    print("KERNEL_OK")
</pallas_src>

<mosaic_0001>
module attributes {stable_mosaic.version = 11 : i64} {
  func.func @kernel(%arg0: i32, %arg1: memref<32x128xf32, #tpu.memory_space<vmem>>, %arg2: memref<128x128xf32, #tpu.memory_space<vmem>>, %arg3: memref<128x128xf32, #tpu.memory_space<vmem>>, %arg4: memref<128x128xf32, #tpu.memory_space<vmem>>, %arg5: memref<128x128xf32, #tpu.memory_space<vmem>>, %arg6: memref<1x128xf32, #tpu.memory_space<vmem>>, %arg7: memref<1x128xf32, #tpu.memory_space<vmem>>, %arg8: memref<1x128xf32, #tpu.memory_space<vmem>>, %arg9: memref<1x128xf32, #tpu.memory_space<vmem>>, %arg10: memref<32x128xf32, #tpu.memory_space<vmem>>) attributes {dimension_semantics = [#tpu.dimension_semantics<parallel>], iteration_bounds = array<i64: 2>, scalar_prefetch = 0 : i64, scratch_operands = 0 : i64, tpu.core_type = #tpu.core_type<tc>, window_params = [{transform_indices = @transform_0, window_bounds = array<i64: 32, 128>}, {pipeline_mode = #tpu.pipeline_mode<synchronous>, transform_indices = @transform_1, window_bounds = array<i64: 128, 128>}, {pipeline_mode = #tpu.pipeline_mode<synchronous>, transform_indices = @transform_2, window_bounds = array<i64: 128, 128>}, {pipeline_mode = #tpu.pipeline_mode<synchronous>, transform_indices = @transform_3, window_bounds = array<i64: 128, 128>}, {pipeline_mode = #tpu.pipeline_mode<synchronous>, transform_indices = @transform_4, window_bounds = array<i64: 128, 128>}, {pipeline_mode = #tpu.pipeline_mode<synchronous>, transform_indices = @transform_5, window_bounds = array<i64: 1, 128>}, {pipeline_mode = #tpu.pipeline_mode<synchronous>, transform_indices = @transform_6, window_bounds = array<i64: 1, 128>}, {pipeline_mode = #tpu.pipeline_mode<synchronous>, transform_indices = @transform_7, window_bounds = array<i64: 1, 128>}, {pipeline_mode = #tpu.pipeline_mode<synchronous>, transform_indices = @transform_8, window_bounds = array<i64: 1, 128>}, {transform_indices = @transform_9, window_bounds = array<i64: 32, 128>}]} {
    %c0 = arith.constant 0 : index
    %c0_0 = arith.constant 0 : index
    %0 = vector.load %arg1[%c0, %c0_0] : memref<32x128xf32, #tpu.memory_space<vmem>>, vector<32x128xf32>
    %c0_1 = arith.constant 0 : index
    %c0_2 = arith.constant 0 : index
    %1 = vector.load %arg2[%c0_1, %c0_2] : memref<128x128xf32, #tpu.memory_space<vmem>>, vector<128x128xf32>
    %cst = arith.constant dense<0.000000e+00> : vector<32x128xf32>
    %2 = tpu.matmul %0, %1, %cst {dimension_numbers = #tpu.dot_dimension_numbers<[1], [0], [0], [1], [0, 0, 1, 1], [], []>} : vector<32x128xf32>, vector<128x128xf32>, vector<32x128xf32> -> vector<32x128xf32>
    %c0_3 = arith.constant 0 : index
    %c0_4 = arith.constant 0 : index
    %3 = vector.load %arg6[%c0_3, %c0_4] : memref<1x128xf32, #tpu.memory_space<vmem>>, vector<1x128xf32>
    %4 = vector.broadcast %3 : vector<1x128xf32> to vector<32x128xf32>
    %5 = arith.addf %2, %4 : vector<32x128xf32>
    %cst_5 = arith.constant 0.000000e+00 : f32
    %6 = vector.broadcast %cst_5 : f32 to vector<32x128xf32>
    %7 = arith.maximumf %5, %6 : vector<32x128xf32>
    %c0_6 = arith.constant 0 : index
    %c0_7 = arith.constant 0 : index
    %8 = vector.load %arg3[%c0_6, %c0_7] : memref<128x128xf32, #tpu.memory_space<vmem>>, vector<128x128xf32>
    %cst_8 = arith.constant dense<0.000000e+00> : vector<32x128xf32>
    %9 = tpu.matmul %7, %8, %cst_8 {dimension_numbers = #tpu.dot_dimension_numbers<[1], [0], [0], [1], [0, 0, 1, 1], [], []>} : vector<32x128xf32>, vector<128x128xf32>, vector<32x128xf32> -> vector<32x128xf32>
    %c0_9 = arith.constant 0 : index
    %c0_10 = arith.constant 0 : index
    %10 = vector.load %arg7[%c0_9, %c0_10] : memref<1x128xf32, #tpu.memory_space<vmem>>, vector<1x128xf32>
    %11 = vector.broadcast %10 : vector<1x128xf32> to vector<32x128xf32>
    %12 = arith.addf %9, %11 : vector<32x128xf32>
    %cst_11 = arith.constant 0.000000e+00 : f32
    %13 = vector.broadcast %cst_11 : f32 to vector<32x128xf32>
    %14 = arith.maximumf %12, %13 : vector<32x128xf32>
    %c0_12 = arith.constant 0 : index
    %c0_13 = arith.constant 0 : index
    %15 = vector.load %arg4[%c0_12, %c0_13] : memref<128x128xf32, #tpu.memory_space<vmem>>, vector<128x128xf32>
    %cst_14 = arith.constant dense<0.000000e+00> : vector<32x128xf32>
    %16 = tpu.matmul %14, %15, %cst_14 {dimension_numbers = #tpu.dot_dimension_numbers<[1], [0], [0], [1], [0, 0, 1, 1], [], []>} : vector<32x128xf32>, vector<128x128xf32>, vector<32x128xf32> -> vector<32x128xf32>
    %c0_15 = arith.constant 0 : index
    %c0_16 = arith.constant 0 : index
    %17 = vector.load %arg8[%c0_15, %c0_16] : memref<1x128xf32, #tpu.memory_space<vmem>>, vector<1x128xf32>
    %18 = vector.broadcast %17 : vector<1x128xf32> to vector<32x128xf32>
    %19 = arith.addf %16, %18 : vector<32x128xf32>
    %cst_17 = arith.constant 0.000000e+00 : f32
    %20 = vector.broadcast %cst_17 : f32 to vector<32x128xf32>
    %21 = arith.maximumf %19, %20 : vector<32x128xf32>
    %c0_18 = arith.constant 0 : index
    %c0_19 = arith.constant 0 : index
    %22 = vector.load %arg5[%c0_18, %c0_19] : memref<128x128xf32, #tpu.memory_space<vmem>>, vector<128x128xf32>
    %cst_20 = arith.constant dense<0.000000e+00> : vector<32x128xf32>
    %23 = tpu.matmul %21, %22, %cst_20 {dimension_numbers = #tpu.dot_dimension_numbers<[1], [0], [0], [1], [0, 0, 1, 1], [], []>} : vector<32x128xf32>, vector<128x128xf32>, vector<32x128xf32> -> vector<32x128xf32>
    %c0_21 = arith.constant 0 : index
    %c0_22 = arith.constant 0 : index
    %24 = vector.load %arg9[%c0_21, %c0_22] : memref<1x128xf32, #tpu.memory_space<vmem>>, vector<1x128xf32>
    %25 = vector.broadcast %24 : vector<1x128xf32> to vector<32x128xf32>
    %26 = arith.addf %23, %25 : vector<32x128xf32>
    %cst_23 = arith.constant 0.000000e+00 : f32
    %27 = vector.broadcast %cst_23 : f32 to vector<32x128xf32>
    %28 = arith.maximumf %26, %27 : vector<32x128xf32>
    %c0_24 = arith.constant 0 : index
    %c0_25 = arith.constant 0 : index
    %29 = vector.load %arg10[%c0_24, %c0_25] : memref<32x128xf32, #tpu.memory_space<vmem>>, vector<32x128xf32>
    tpu.vector_store %arg10[%c0_24, %c0_25], %28 {strides = array<i32>} : memref<32x128xf32, #tpu.memory_space<vmem>>, vector<32x128xf32>,
    return
  }
  func.func @transform_0(%arg0: i32) -> (i32, i32) {
    %c0_i32 = arith.constant 0 : i32
    %c0_i32_0 = arith.constant 0 : i32
    return %arg0, %c0_i32 : i32, i32
  }
  func.func @transform_1(%arg0: i32) -> (i32, i32) {
    %c0_i32 = arith.constant 0 : i32
    %c0_i32_0 = arith.constant 0 : i32
    %c0_i32_1 = arith.constant 0 : i32
    return %c0_i32, %c0_i32_0 : i32, i32
  }
  func.func @transform_2(%arg0: i32) -> (i32, i32) {
    %c0_i32 = arith.constant 0 : i32
    %c0_i32_0 = arith.constant 0 : i32
    %c0_i32_1 = arith.constant 0 : i32
    return %c0_i32, %c0_i32_0 : i32, i32
  }
  func.func @transform_3(%arg0: i32) -> (i32, i32) {
    %c0_i32 = arith.constant 0 : i32
    %c0_i32_0 = arith.constant 0 : i32
    %c0_i32_1 = arith.constant 0 : i32
    return %c0_i32, %c0_i32_0 : i32, i32
  }
  func.func @transform_4(%arg0: i32) -> (i32, i32) {
    %c0_i32 = arith.constant 0 : i32
    %c0_i32_0 = arith.constant 0 : i32
    %c0_i32_1 = arith.constant 0 : i32
    return %c0_i32, %c0_i32_0 : i32, i32
  }
  func.func @transform_5(%arg0: i32) -> (i32, i32) {
    %c0_i32 = arith.constant 0 : i32
    %c0_i32_0 = arith.constant 0 : i32
    %c0_i32_1 = arith.constant 0 : i32
    return %c0_i32, %c0_i32_0 : i32, i32
  }
  func.func @transform_6(%arg0: i32) -> (i32, i32) {
    %c0_i32 = arith.constant 0 : i32
    %c0_i32_0 = arith.constant 0 : i32
    %c0_i32_1 = arith.constant 0 : i32
    return %c0_i32, %c0_i32_0 : i32, i32
  }
  func.func @transform_7(%arg0: i32) -> (i32, i32) {
    %c0_i32 = arith.constant 0 : i32
    %c0_i32_0 = arith.constant 0 : i32
    %c0_i32_1 = arith.constant 0 : i32
    return %c0_i32, %c0_i32_0 : i32, i32
  }
  func.func @transform_8(%arg0: i32) -> (i32, i32) {
    %c0_i32 = arith.constant 0 : i32
    %c0_i32_0 = arith.constant 0 : i32
    %c0_i32_1 = arith.constant 0 : i32
    return %c0_i32, %c0_i32_0 : i32, i32
  }
  func.func @transform_9(%arg0: i32) -> (i32, i32) {
    %c0_i32 = arith.constant 0 : i32
    %c0_i32_0 = arith.constant 0 : i32
    return %arg0, %c0_i32 : i32, i32
  }
}

</mosaic_0001>

<llo_original>
// kernel: tpu_custom_call.1
$region0: #{tpu_custom_call.1}
  #allocation0 [shape = 'u32[]', space=smem, size = 0x4, offset = 0x4, fixed_abs, tag = 'smem constant byte address 0x4 - core index']
  #allocation1 [shape = 'u32[72,128]{1,0:T(1,128)}', space=vmem, size = 0x9000, scoped, tag = 'internal scratch']
  %s0 = inlined_call_operand.hbm [shape: f32[64,128], index: 0, kind: input, shape index: {}]
  %s1 = inlined_call_operand.hbm [shape: f32[128,128], index: 1, kind: input, shape index: {}]
  %s2 = inlined_call_operand.hbm [shape: f32[128,128], index: 2, kind: input, shape index: {}]
  %s3 = inlined_call_operand.hbm [shape: f32[128,128], index: 3, kind: input, shape index: {}]
  %s4 = inlined_call_operand.hbm [shape: f32[128,128], index: 4, kind: input, shape index: {}]
  %s5 = inlined_call_operand.vmem [shape: f32[1,128], index: 5, kind: input, shape index: {}]
  %s6 = inlined_call_operand.vmem [shape: f32[1,128], index: 6, kind: input, shape index: {}]
  %s7 = inlined_call_operand.vmem [shape: f32[1,128], index: 7, kind: input, shape index: {}]
  %s8 = inlined_call_operand.vmem [shape: f32[1,128], index: 8, kind: input, shape index: {}]
  %s9 = inlined_call_operand.hbm [shape: f32[64,128], index: 9, kind: output, shape index: {}]
  %s10 = sld [smem:[#allocation0]]
  $region89: #{tpu_custom_call.1} parent=0
    _
  %s12 = ssub.s32 1, %s10
  %s13 = scalar_select 0, %s12, %s10
  $region1: #{tpu_custom_call.1} parent=0
    #allocation2 [shape = 'u8[32768]{0}', space=vmem, size = 0x8000, scoped, tag = 'input window, operand 0']
    #allocation3 [shape = 's32[2]{0}', space=sflag, size = 0x8, scoped, tag = 'scoped memory for tpu_custom_call.1']
    #allocation4 [shape = 's32[2]{0}', space=sflag, size = 0x8, scoped, tag = 'scoped memory for tpu_custom_call.1']
    #allocation5 [shape = 'u8[65536]{0}', space=vmem, size = 0x10000, scoped, tag = 'input window, operand 1, single buffered']
    #allocation6 [shape = 's32[1]{0}', space=sflag, size = 0x4, scoped, tag = 'scoped memory for tpu_custom_call.1']
    #allocation7 [shape = 'u8[65536]{0}', space=vmem, size = 0x10000, scoped, tag = 'input window, operand 2, single buffered']
    #allocation8 [shape = 'u8[65536]{0}', space=vmem, size = 0x10000, scoped, tag = 'input window, operand 3, single buffered']
    #allocation9 [shape = 's32[1]{0}', space=sflag, size = 0x4, scoped, tag = 'scoped memory for tpu_custom_call.1']
    #allocation10 [shape = 'u8[65536]{0}', space=vmem, size = 0x10000, scoped, tag = 'input window, operand 4, single buffered']
    #allocation11 [shape = 'u8[32768]{0}', space=vmem, size = 0x8000, scoped, tag = 'output window, operand 0']
    %14 = vsyncpa [#allocation3], 0
    %s15 = scalar_lea.sflag [#allocation3], 1
    %16 = vsyncpa %s15, 0
    %17 = vsyncpa [#allocation6], 0
    %18 = vsyncpa [#allocation9], 0
    %19 = vsyncpa [#allocation4], 0
    %s20 = scalar_lea.sflag [#allocation4], 1
    %21 = vsyncpa %s20, 0
    loop: start=0, step=1, limit=4
    $region2: #{tpu_custom_call.1} parent=1 // loop_pre_header
      _
    $region3: #{tpu_custom_call.1} parent=1 // loop_header
      %s23 = sphi 0, %s27
      %p24 = scmp.ge.s32.totalorder %s23, 4
      %s33 = sphi 0, %s35
      %s36 = sphi 0, %s33
      %s37 = sphi 0, %s36
      %s53 = sphi 0, %s37
      %s57 = sphi 0, %s57
      %s59 = sphi 0, %s57
      %s60 = sphi 0, %s59
      %s74 = sphi 0, %s60
      %s78 = sphi 0, %s78
      %s80 = sphi 0, %s78
      %s81 = sphi 0, %s80
      %s95 = sphi 0, %s81
      %s99 = sphi 0, %s99
      %s101 = sphi 0, %s99
      %s102 = sphi 0, %s101
      %s116 = sphi 0, %s102
      %s120 = sphi 0, %s120
      %s122 = sphi 0, %s120
      %s123 = sphi 0, %s122
      %s137 = sphi 0, %s123
      %s141 = sphi 0, %s141
      %s143 = sphi 0, %s141
      %s144 = sphi 0, %s143
      %s158 = sphi 0, %s144
      %s162 = sphi 0, %s162
      %s164 = sphi 0, %s162
      %s165 = sphi 0, %s164
      %s179 = sphi 0, %s165
      %s183 = sphi 0, %s183
      %s185 = sphi 0, %s183
      %s186 = sphi 0, %s185
      %s200 = sphi 0, %s186
      %s204 = sphi 0, %s204
      %s206 = sphi 0, %s204
      %s207 = sphi 0, %s206
      %s221 = sphi 0, %s207
      %s227 = sphi 0, %s229
      %s230 = sphi 0, %s227
      %s231 = sphi 0, %s230
      %s247 = sphi 0, %s231
    $region4: #{tpu_custom_call.1} parent=1 // loop_header_branch
      %26 = sbr.rel (%p24) target = $region8
    $region5: #{tpu_custom_call.1} parent=1 // loop_body
      %s28 = ssub.s32 %s23, 1
      %s29 = ssub.s32 %s23, 2
      %s30 = sadd.s32 %s23, 1
      %s31 = ssub.s32 %s23, %s30
      %p32 = scmp.eq.s32.totalorder %s31, 0
      %s34 = sadd.s32 %s33, 1
      %s35 = scalar_select %p32, %s33, %s34
      %p38 = pneg %p32
      %p39 = scmp.eq.s32.totalorder %s23, 1
      %p40 = por %p38, %p39
      %p41 = scmp.ne.s32.totalorder %s33, %s36
      %p42 = scmp.eq.s32.totalorder %s23, 0
      %p43 = por %p41, %p42
      %p44 = scmp.ne.s32.totalorder %s33, %s36
      %p45 = scmp.eq.s32.totalorder %s28, 1
      %p46 = por %p44, %p45
      %p47 = scmp.ne.s32.totalorder %s36, %s37
      %p48 = scmp.eq.s32.totalorder %s28, 0
      %p49 = por %p47, %p48
      %p50 = scmp.ne.s32.totalorder %s36, %s37
      %p51 = scmp.eq.s32.totalorder %s29, 1
      %p52 = por %p50, %p51
      %p54 = scmp.ne.s32.totalorder %s37, %s53
      %p55 = scmp.eq.s32.totalorder %s29, 0
      %p56 = por %p54, %p55
      %s58 = sadd.s32 %s57, 1
      %p61 = scmp.eq.s32.totalorder %s23, 1
      %p62 = scmp.ne.s32.totalorder %s57, %s59
      %p63 = scmp.eq.s32.totalorder %s23, 0
      %p64 = por %p62, %p63
      %p65 = scmp.ne.s32.totalorder %s57, %s59
      %p66 = scmp.eq.s32.totalorder %s28, 1
      %p67 = por %p65, %p66
      %p68 = scmp.ne.s32.totalorder %s59, %s60
      %p69 = scmp.eq.s32.totalorder %s28, 0
      %p70 = por %p68, %p69
      %p71 = scmp.ne.s32.totalorder %s59, %s60
      %p72 = scmp.eq.s32.totalorder %s29, 1
      %p73 = por %p71, %p72
      %p75 = scmp.ne.s32.totalorder %s60, %s74
      %p76 = scmp.eq.s32.totalorder %s29, 0
      %p77 = por %p75, %p76
      %s79 = sadd.s32 %s78, 1
      %p82 = scmp.eq.s32.totalorder %s23, 1
      %p83 = scmp.ne.s32.totalorder %s78, %s80
      %p84 = scmp.eq.s32.totalorder %s23, 0
      %p85 = por %p83, %p84
      %p86 = scmp.ne.s32.totalorder %s78, %s80
      %p87 = scmp.eq.s32.totalorder %s28, 1
      %p88 = por %p86, %p87
      %p89 = scmp.ne.s32.totalorder %s80, %s81
      %p90 = scmp.eq.s32.totalorder %s28, 0
      %p91 = por %p89, %p90
      %p92 = scmp.ne.s32.totalorder %s80, %s81
      %p93 = scmp.eq.s32.totalorder %s29, 1
      %p94 = por %p92, %p93
      %p96 = scmp.ne.s32.totalorder %s81, %s95
      %p97 = scmp.eq.s32.totalorder %s29, 0
      %p98 = por %p96, %p97
      %s100 = sadd.s32 %s99, 1
      %p103 = scmp.eq.s32.totalorder %s23, 1
      %p104 = scmp.ne.s32.totalorder %s99, %s101
      %p105 = scmp.eq.s32.totalorder %s23, 0
      %p106 = por %p104, %p105
      %p107 = scmp.ne.s32.totalorder %s99, %s101
      %p108 = scmp.eq.s32.totalorder %s28, 1
      %p109 = por %p107, %p108
      %p110 = scmp.ne.s32.totalorder %s101, %s102
      %p111 = scmp.eq.s32.totalorder %s28, 0
      %p112 = por %p110, %p111
      %p113 = scmp.ne.s32.totalorder %s101, %s102
      %p114 = scmp.eq.s32.totalorder %s29, 1
      %p115 = por %p113, %p114
      %p117 = scmp.ne.s32.totalorder %s102, %s116
      %p118 = scmp.eq.s32.totalorder %s29, 0
      %p119 = por %p117, %p118
      %s121 = sadd.s32 %s120, 1
      %p124 = scmp.eq.s32.totalorder %s23, 1
      %p125 = scmp.ne.s32.totalorder %s120, %s122
      %p126 = scmp.eq.s32.totalorder %s23, 0
      %p127 = por %p125, %p126
      %p128 = scmp.ne.s32.totalorder %s120, %s122
      %p129 = scmp.eq.s32.totalorder %s28, 1
      %p130 = por %p128, %p129
      %p131 = scmp.ne.s32.totalorder %s122, %s123
      %p132 = scmp.eq.s32.totalorder %s28, 0
      %p133 = por %p131, %p132
      %p134 = scmp.ne.s32.totalorder %s122, %s123
      %p135 = scmp.eq.s32.totalorder %s29, 1
      %p136 = por %p134, %p135
      %p138 = scmp.ne.s32.totalorder %s123, %s137
      %p139 = scmp.eq.s32.totalorder %s29, 0
      %p140 = por %p138, %p139
      %s142 = sadd.s32 %s141, 1
      %p145 = scmp.eq.s32.totalorder %s23, 1
      %p146 = scmp.ne.s32.totalorder %s141, %s143
      %p147 = scmp.eq.s32.totalorder %s23, 0
      %p148 = por %p146, %p147
      %p149 = scmp.ne.s32.totalorder %s141, %s143
      %p150 = scmp.eq.s32.totalorder %s28, 1
      %p151 = por %p149, %p150
      %p152 = scmp.ne.s32.totalorder %s143, %s144
      %p153 = scmp.eq.s32.totalorder %s28, 0
      %p154 = por %p152, %p153
      %p155 = scmp.ne.s32.totalorder %s143, %s144
      %p156 = scmp.eq.s32.totalorder %s29, 1
      %p157 = por %p155, %p156
      %p159 = scmp.ne.s32.totalorder %s144, %s158
      %p160 = scmp.eq.s32.totalorder %s29, 0
      %p161 = por %p159, %p160
      %s163 = sadd.s32 %s162, 1
      %p166 = scmp.eq.s32.totalorder %s23, 1
      %p167 = scmp.ne.s32.totalorder %s162, %s164
      %p168 = scmp.eq.s32.totalorder %s23, 0
      %p169 = por %p167, %p168
      %p170 = scmp.ne.s32.totalorder %s162, %s164
      %p171 = scmp.eq.s32.totalorder %s28, 1
      %p172 = por %p170, %p171
      %p173 = scmp.ne.s32.totalorder %s164, %s165
      %p174 = scmp.eq.s32.totalorder %s28, 0
      %p175 = por %p173, %p174
      %p176 = scmp.ne.s32.totalorder %s164, %s165
      %p177 = scmp.eq.s32.totalorder %s29, 1
      %p178 = por %p176, %p177
      %p180 = scmp.ne.s32.totalorder %s165, %s179
      %p181 = scmp.eq.s32.totalorder %s29, 0
      %p182 = por %p180, %p181
      %s184 = sadd.s32 %s183, 1
      %p187 = scmp.eq.s32.totalorder %s23, 1
      %p188 = scmp.ne.s32.totalorder %s183, %s185
      %p189 = scmp.eq.s32.totalorder %s23, 0
      %p190 = por %p188, %p189
      %p191 = scmp.ne.s32.totalorder %s183, %s185
      %p192 = scmp.eq.s32.totalorder %s28, 1
      %p193 = por %p191, %p192
      %p194 = scmp.ne.s32.totalorder %s185, %s186
      %p195 = scmp.eq.s32.totalorder %s28, 0
      %p196 = por %p194, %p195
      %p197 = scmp.ne.s32.totalorder %s185, %s186
      %p198 = scmp.eq.s32.totalorder %s29, 1
      %p199 = por %p197, %p198
      %p201 = scmp.ne.s32.totalorder %s186, %s200
      %p202 = scmp.eq.s32.totalorder %s29, 0
      %p203 = por %p201, %p202
      %s205 = sadd.s32 %s204, 1
      %p208 = scmp.eq.s32.totalorder %s23, 1
      %p209 = scmp.ne.s32.totalorder %s204, %s206
      %p210 = scmp.eq.s32.totalorder %s23, 0
      %p211 = por %p209, %p210
      %p212 = scmp.ne.s32.totalorder %s204, %s206
      %p213 = scmp.eq.s32.totalorder %s28, 1
      %p214 = por %p212, %p213
      %p215 = scmp.ne.s32.totalorder %s206, %s207
      %p216 = scmp.eq.s32.totalorder %s28, 0
      %p217 = por %p215, %p216
      %p218 = scmp.ne.s32.totalorder %s206, %s207
      %p219 = scmp.eq.s32.totalorder %s29, 1
      %p220 = por %p218, %p219
      %p222 = scmp.ne.s32.totalorder %s207, %s221
      %p223 = scmp.eq.s32.totalorder %s29, 0
      %p224 = por %p222, %p223
      %s225 = ssub.s32 %s23, %s30
      %p226 = scmp.eq.s32.totalorder %s225, 0
      %s228 = sadd.s32 %s227, 1
      %s229 = scalar_select %p226, %s227, %s228
      %p232 = pneg %p226
      %p233 = scmp.eq.s32.totalorder %s23, 1
      %p234 = por %p232, %p233
      %p235 = scmp.ne.s32.totalorder %s227, %s230
      %p236 = scmp.eq.s32.totalorder %s23, 0
      %p237 = por %p235, %p236
      %p238 = scmp.ne.s32.totalorder %s227, %s230
      %p239 = scmp.eq.s32.totalorder %s28, 1
      %p240 = por %p238, %p239
      %p241 = scmp.ne.s32.totalorder %s230, %s231
      %p242 = scmp.eq.s32.totalorder %s28, 0
      %p243 = por %p241, %p242
      %p244 = scmp.ne.s32.totalorder %s230, %s231
      %p245 = scmp.eq.s32.totalorder %s29, 1
      %p246 = por %p244, %p245
      %p248 = scmp.ne.s32.totalorder %s231, %s247
      %p249 = scmp.eq.s32.totalorder %s29, 0
      %p250 = por %p248, %p249
      %p251 = scmp.le.s32.totalorder 1, %s23
      %p252 = scmp.lt.s32.totalorder %s23, 3
      %p253 = pnand %p251, %p252
      %p254 = pneg %p253
      // Predicated region
      $region9: #{tpu_custom_call.1} parent=5 // pred_check
        _
      $region10: #{tpu_custom_call.1} parent=5 // pred_check_branch
        %256 = sbr.rel (%p253) target = $region12
      $region11: #{tpu_custom_call.1} parent=5 // pred_region
        %s257 = ssub.s32 %s23, 1
        // Predicated region
        $region13: #{tpu_custom_call.1} parent=11 // pred_check
          %p258 = pneg %p70
        $region14: #{tpu_custom_call.1} parent=11 // pred_check_branch
          %260 = sbr.rel (%p258) target = $region16
        $region15: #{tpu_custom_call.1} parent=11 // pred_region
          %262 = vsyncadd [#allocation6], 0
          %s263 = sshll.u32 %s1, 4
          %s264 = int_to_ptr.hbm [resolvable:$true] %s263
          %s265 = sshll.u32 [#allocation5], 4
          %s266 = int_to_ptr.vmem [resolvable:$true] %s265
          %271 = dma.hbm_to_vmem [thread:$0]  %s264, 2048, %s266, [#allocation6], 128, 128, 8
        $region16: #{tpu_custom_call.1} parent=11 // pred_fallthru
          _
        // Predicated region
        $region17: #{tpu_custom_call.1} parent=11 // pred_check
          %p272 = pneg %p91
        $region18: #{tpu_custom_call.1} parent=11 // pred_check_branch
          %274 = sbr.rel (%p272) target = $region20
        $region19: #{tpu_custom_call.1} parent=11 // pred_region
          %276 = vsyncadd [#allocation6], 0
          %s277 = sshll.u32 %s2, 4
          %s278 = int_to_ptr.hbm [resolvable:$true] %s277
          %s279 = sshll.u32 [#allocation7], 4
          %s280 = int_to_ptr.vmem [resolvable:$true] %s279
          %285 = dma.hbm_to_vmem [thread:$0]  %s278, 2048, %s280, [#allocation6], 128, 128, 8
        $region20: #{tpu_custom_call.1} parent=11 // pred_fallthru
          _
        // Predicated region
        $region21: #{tpu_custom_call.1} parent=11 // pred_check
          %p286 = pneg %p112
        $region22: #{tpu_custom_call.1} parent=11 // pred_check_branch
          %288 = sbr.rel (%p286) target = $region24
        $region23: #{tpu_custom_call.1} parent=11 // pred_region
          %290 = vsyncadd [#allocation9], 0
          %s291 = sshll.u32 %s3, 4
          %s292 = int_to_ptr.hbm [resolvable:$true] %s291
          %s293 = sshll.u32 [#allocation8], 4
          %s294 = int_to_ptr.vmem [resolvable:$true] %s293
          %299 = dma.hbm_to_vmem [thread:$0]  %s292, 2048, %s294, [#allocation9], 128, 128, 8
        $region24: #{tpu_custom_call.1} parent=11 // pred_fallthru
          _
        // Predicated region
        $region25: #{tpu_custom_call.1} parent=11 // pred_check
          %p300 = pneg %p133
        $region26: #{tpu_custom_call.1} parent=11 // pred_check_branch
          %302 = sbr.rel (%p300) target = $region28
        $region27: #{tpu_custom_call.1} parent=11 // pred_region
          %304 = vsyncadd [#allocation9], 0
          %s305 = sshll.u32 %s4, 4
          %s306 = int_to_ptr.hbm [resolvable:$true] %s305
          %s307 = sshll.u32 [#allocation10], 4
          %s308 = int_to_ptr.vmem [resolvable:$true] %s307
          %313 = dma.hbm_to_vmem [thread:$0]  %s306, 2048, %s308, [#allocation9], 128, 128, 8
        $region28: #{tpu_custom_call.1} parent=11 // pred_fallthru
          _
        // Predicated region
        $region29: #{tpu_custom_call.1} parent=11 // pred_check
          %p314 = pneg %p154
        $region30: #{tpu_custom_call.1} parent=11 // pred_check_branch
          %316 = sbr.rel (%p314) target = $region32
        $region31: #{tpu_custom_call.1} parent=11 // pred_region
          _
        $region32: #{tpu_custom_call.1} parent=11 // pred_fallthru
          _
        // Predicated region
        $region33: #{tpu_custom_call.1} parent=11 // pred_check
          %p317 = pneg %p175
        $region34: #{tpu_custom_call.1} parent=11 // pred_check_branch
          %319 = sbr.rel (%p317) target = $region36
        $region35: #{tpu_custom_call.1} parent=11 // pred_region
          _
        $region36: #{tpu_custom_call.1} parent=11 // pred_fallthru
          _
        // Predicated region
        $region37: #{tpu_custom_call.1} parent=11 // pred_check
          %p320 = pneg %p196
        $region38: #{tpu_custom_call.1} parent=11 // pred_check_branch
          %322 = sbr.rel (%p320) target = $region40
        $region39: #{tpu_custom_call.1} parent=11 // pred_region
          _
        $region40: #{tpu_custom_call.1} parent=11 // pred_fallthru
          _
        // Predicated region
        $region41: #{tpu_custom_call.1} parent=11 // pred_check
          %p323 = pneg %p217
        $region42: #{tpu_custom_call.1} parent=11 // pred_check_branch
          %325 = sbr.rel (%p323) target = $region44
        $region43: #{tpu_custom_call.1} parent=11 // pred_region
          _
        $region44: #{tpu_custom_call.1} parent=11 // pred_fallthru
          _
      $region12: #{tpu_custom_call.1} parent=5 // pred_fallthru
        _
      %p326 = scmp.lt.s32.totalorder %s23, 2
      // Predicated region
      $region45: #{tpu_custom_call.1} parent=5 // pred_check
        %p327 = pneg %p326
      $region46: #{tpu_custom_call.1} parent=5 // pred_check_branch
        %329 = sbr.rel (%p327) target = $region48
      $region47: #{tpu_custom_call.1} parent=5 // pred_region
        // Predicated region
        $region49: #{tpu_custom_call.1} parent=47 // pred_check
          %p330 = pneg %p43
        $region50: #{tpu_custom_call.1} parent=47 // pred_check_branch
          %332 = sbr.rel (%p330) target = $region52
        $region51: #{tpu_custom_call.1} parent=47 // pred_region
          %s333 = sand.u32 %s33, 1
          %s334 = scalar_lea.sflag [#allocation3], %s333
          %s335 = sand.u32 %s33, 1
          %s336 = smul.addr %s335, 32
          %s337 = scalar_lea.vmem [#allocation2], %s336
          %s338 = smul.u32 4, %s23
          %340 = vsyncadd %s334, 0
          %s341 = smul.addr %s338, 8
          %s342 = scalar_lea.hbm %s0, %s341
          %s343 = sshll.u32 %s342, 4
          %s344 = int_to_ptr.hbm [resolvable:$true] %s343
          %s345 = sshll.u32 %s337, 4
          %s346 = int_to_ptr.vmem [resolvable:$true] %s345
          %351 = dma.hbm_to_vmem [thread:$0]  %s344, 512, %s346, %s334, 128, 128, 8
        $region52: #{tpu_custom_call.1} parent=47 // pred_fallthru
          _
      $region48: #{tpu_custom_call.1} parent=5 // pred_fallthru
        _
      %p352 = scmp.le.s32.totalorder 1, %s23
      %p353 = scmp.lt.s32.totalorder %s23, 3
      %p354 = pnand %p352, %p353
      %p355 = pneg %p354
      // Predicated region
      $region53: #{tpu_custom_call.1} parent=5 // pred_check
        _
      $region54: #{tpu_custom_call.1} parent=5 // pred_check_branch
        %357 = sbr.rel (%p354) target = $region56
      $region55: #{tpu_custom_call.1} parent=5 // pred_region
        %s358 = ssub.s32 %s23, 1
        %s359 = sand.u32 %s36, 1
        %s360 = scalar_lea.sflag [#allocation3], %s359
        %s361 = sand.u32 %s36, 1
        %s362 = smul.addr %s361, 32
        %s363 = scalar_lea.vmem [#allocation2], %s362
        // Predicated region
        $region57: #{tpu_custom_call.1} parent=55 // pred_check
          %p364 = pneg %p49
        $region58: #{tpu_custom_call.1} parent=55 // pred_check_branch
          %366 = sbr.rel (%p364) target = $region60
        $region59: #{tpu_custom_call.1} parent=55 // pred_region
          %368 = dma.done %s360, 512
        $region60: #{tpu_custom_call.1} parent=55 // pred_fallthru
          _
        // Predicated region
        $region61: #{tpu_custom_call.1} parent=55 // pred_check
          %p369 = pneg %p70
        $region62: #{tpu_custom_call.1} parent=55 // pred_check_branch
          %371 = sbr.rel (%p369) target = $region64
        $region63: #{tpu_custom_call.1} parent=55 // pred_region
          %373 = dma.done [#allocation6], 2048
        $region64: #{tpu_custom_call.1} parent=55 // pred_fallthru
          _
        // Predicated region
        $region65: #{tpu_custom_call.1} parent=55 // pred_check
          %p374 = pneg %p91
        $region66: #{tpu_custom_call.1} parent=55 // pred_check_branch
          %376 = sbr.rel (%p374) target = $region68
        $region67: #{tpu_custom_call.1} parent=55 // pred_region
          %378 = dma.done [#allocation6], 2048
        $region68: #{tpu_custom_call.1} parent=55 // pred_fallthru
          _
        // Predicated region
        $region69: #{tpu_custom_call.1} parent=55 // pred_check
          %p379 = pneg %p112
        $region70: #{tpu_custom_call.1} parent=55 // pred_check_branch
          %381 = sbr.rel (%p379) target = $region72
        $region71: #{tpu_custom_call.1} parent=55 // pred_region
          %383 = dma.done [#allocation9], 2048
        $region72: #{tpu_custom_call.1} parent=55 // pred_fallthru
          _
        // Predicated region
        $region73: #{tpu_custom_call.1} parent=55 // pred_check
          %p384 = pneg %p133
        $region74: #{tpu_custom_call.1} parent=55 // pred_check_branch
          %386 = sbr.rel (%p384) target = $region76
        $region75: #{tpu_custom_call.1} parent=55 // pred_region
          %388 = dma.done [#allocation9], 2048
        $region76: #{tpu_custom_call.1} parent=55 // pred_fallthru
          _
        %s389 = sand.u32 %s36, 1
        %s390 = scalar_lea.sflag [#allocation3], %s389
        %s391 = sand.u32 %s36, 1
        %s392 = smul.addr %s391, 32
        %s393 = scalar_lea.vmem [#allocation2], %s392
        %p394 = pneg %p49
        %p395 = pneg %p46
        %p396 = pneg %p70
        %p397 = pneg %p67
        %p398 = pneg %p91
        %p399 = pneg %p88
        %p400 = pneg %p112
        %p401 = pneg %p109
        %p402 = pneg %p133
        %p403 = pneg %p130
        %p404 = pneg %p154
        %p405 = pneg %p151
        %p406 = pneg %p175
        %p407 = pneg %p172
        %p408 = pneg %p196
        %p409 = pneg %p193
        %p410 = pneg %p217
        %p411 = pneg %p214
        %p412 = pneg %p243
        %p413 = pneg %p240
        %s414 = sand.u32 %s230, 1
        %s415 = scalar_lea.sflag [#allocation4], %s414
        %s416 = sand.u32 %s230, 1
        %s417 = smul.addr %s416, 32
        %s418 = scalar_lea.vmem [#allocation11], %s417
        %s419 = smul.u32 4, %s28
        %s420 = smul.u32 4, %s28
        %v421 = vld [vmem:[%s363] sm:$0xff]
        %v422 = vld [vmem:[%s363 + $0x8] sm:$0xff]
        %v423 = vld [vmem:[%s363 + $0x10] sm:$0xff]
        %v424 = vld [vmem:[%s363 + $0x18] sm:$0xff]
        %v425 = vld [vmem:[#allocation5] sm:$0xff]
        %v426 = vld [vmem:[#allocation5 + $0x8] sm:$0xff]
        %v427 = vld [vmem:[#allocation5 + $0x10] sm:$0xff]
        %v428 = vld [vmem:[#allocation5 + $0x18] sm:$0xff]
        %v429 = vld [vmem:[#allocation5 + $0x20] sm:$0xff]
        %v430 = vld [vmem:[#allocation5 + $0x28] sm:$0xff]
        %v431 = vld [vmem:[#allocation5 + $0x30] sm:$0xff]
        %v432 = vld [vmem:[#allocation5 + $0x38] sm:$0xff]
        %v433 = vld [vmem:[#allocation5 + $0x40] sm:$0xff]
        %v434 = vld [vmem:[#allocation5 + $0x48] sm:$0xff]
        %v435 = vld [vmem:[#allocation5 + $0x50] sm:$0xff]
        %v436 = vld [vmem:[#allocation5 + $0x58] sm:$0xff]
        %v437 = vld [vmem:[#allocation5 + $0x60] sm:$0xff]
        %v438 = vld [vmem:[#allocation5 + $0x68] sm:$0xff]
        %v439 = vld [vmem:[#allocation5 + $0x70] sm:$0xff]
        %v440 = vld [vmem:[#allocation5 + $0x78] sm:$0xff]
        %v441 = vld [vmem:[%s5] sm:$0x1]
        %v443 = vperm.slane %v441, 0
        %445 = vmatpush.msra.mxu0 %v440
        %446 = vmatpush.msra.mxu0 %v439
        %447 = vmatpush.msra.mxu0 %v438
        %448 = vmatpush.msra.mxu0 %v437
        %449 = vmatpush.msra.mxu0 %v436
        %450 = vmatpush.msra.mxu0 %v435
        %451 = vmatpush.msra.mxu0 %v434
        %452 = vmatpush.msra.mxu0 %v433
        %453 = vmatpush.msra.mxu0 %v432
        %454 = vmatpush.msra.mxu0 %v431
        %455 = vmatpush.msra.mxu0 %v430
        %456 = vmatpush.msra.mxu0 %v429
        %457 = vmatpush.msra.mxu0 %v428
        %458 = vmatpush.msra.mxu0 %v427
        %459 = vmatpush.msra.mxu0 %v426
        %460 = vmatpush.msra.mxu0 %v425
        %461 = vmatmul.f32.gmra.mxu0 %v421
        %v462 = vpop.f32.mrf.mxu0
        %v463 = vadd.f32 %v443, %v462
        %464 = vmatmul.f32.gmra.mxu0 %v422
        %v465 = vpop.f32.mrf.mxu0
        %v466 = vadd.f32 %v443, %v465
        %467 = vmatmul.f32.gmra.mxu0 %v423
        %v468 = vpop.f32.mrf.mxu0
        %v469 = vadd.f32 %v443, %v468
        %470 = vmatmul.f32.gmra.mxu0 %v424
        %v471 = vpop.f32.mrf.mxu0
        %v472 = vadd.f32 %v443, %v471
        %473 = vdwg.mxu0
        %v474 = vmax.f32 %v463, 0.0
        %v475 = vmax.f32 %v466, 0.0
        %v476 = vmax.f32 %v469, 0.0
        %v477 = vmax.f32 %v472, 0.0
        %v478 = vld [vmem:[#allocation7] sm:$0xff]
        %v479 = vld [vmem:[#allocation7 + $0x8] sm:$0xff]
        %v480 = vld [vmem:[#allocation7 + $0x10] sm:$0xff]
        %v481 = vld [vmem:[#allocation7 + $0x18] sm:$0xff]
        %v482 = vld [vmem:[#allocation7 + $0x20] sm:$0xff]
        %v483 = vld [vmem:[#allocation7 + $0x28] sm:$0xff]
        %v484 = vld [vmem:[#allocation7 + $0x30] sm:$0xff]
        %v485 = vld [vmem:[#allocation7 + $0x38] sm:$0xff]
        %v486 = vld [vmem:[#allocation7 + $0x40] sm:$0xff]
        %v487 = vld [vmem:[#allocation7 + $0x48] sm:$0xff]
        %v488 = vld [vmem:[#allocation7 + $0x50] sm:$0xff]
        %v489 = vld [vmem:[#allocation7 + $0x58] sm:$0xff]
        %v490 = vld [vmem:[#allocation7 + $0x60] sm:$0xff]
        %v491 = vld [vmem:[#allocation7 + $0x68] sm:$0xff]
        %v492 = vld [vmem:[#allocation7 + $0x70] sm:$0xff]
        %v493 = vld [vmem:[#allocation7 + $0x78] sm:$0xff]
        %v494 = vld [vmem:[%s6] sm:$0x1]
        %v496 = vperm.slane %v494, 0
        %498 = vmatpush.msra.mxu0 %v493
        %499 = vmatpush.msra.mxu0 %v492
        %500 = vmatpush.msra.mxu0 %v491
        %501 = vmatpush.msra.mxu0 %v490
        %502 = vmatpush.msra.mxu0 %v489
        %503 = vmatpush.msra.mxu0 %v488
        %504 = vmatpush.msra.mxu0 %v487
        %505 = vmatpush.msra.mxu0 %v486
        %506 = vmatpush.msra.mxu0 %v485
        %507 = vmatpush.msra.mxu0 %v484
        %508 = vmatpush.msra.mxu0 %v483
        %509 = vmatpush.msra.mxu0 %v482
        %510 = vmatpush.msra.mxu0 %v481
        %511 = vmatpush.msra.mxu0 %v480
        %512 = vmatpush.msra.mxu0 %v479
        %513 = vmatpush.msra.mxu0 %v478
        %514 = vmatmul.f32.gmra.mxu0 %v474
        %v515 = vpop.f32.mrf.mxu0
        %v516 = vadd.f32 %v496, %v515
        %517 = vmatmul.f32.gmra.mxu0 %v475
        %v518 = vpop.f32.mrf.mxu0
        %v519 = vadd.f32 %v496, %v518
        %520 = vmatmul.f32.gmra.mxu0 %v476
        %v521 = vpop.f32.mrf.mxu0
        %v522 = vadd.f32 %v496, %v521
        %523 = vmatmul.f32.gmra.mxu0 %v477
        %v524 = vpop.f32.mrf.mxu0
        %v525 = vadd.f32 %v496, %v524
        %526 = vdwg.mxu0
        %v527 = vmax.f32 %v516, 0.0
        %v528 = vmax.f32 %v519, 0.0
        %v529 = vmax.f32 %v522, 0.0
        %v530 = vmax.f32 %v525, 0.0
        %v531 = vld [vmem:[#allocation8] sm:$0xff]
        %v532 = vld [vmem:[#allocation8 + $0x8] sm:$0xff]
        %v533 = vld [vmem:[#allocation8 + $0x10] sm:$0xff]
        %v534 = vld [vmem:[#allocation8 + $0x18] sm:$0xff]
        %v535 = vld [vmem:[#allocation8 + $0x20] sm:$0xff]
        %v536 = vld [vmem:[#allocation8 + $0x28] sm:$0xff]
        %v537 = vld [vmem:[#allocation8 + $0x30] sm:$0xff]
        %v538 = vld [vmem:[#allocation8 + $0x38] sm:$0xff]
        %v539 = vld [vmem:[#allocation8 + $0x40] sm:$0xff]
        %v540 = vld [vmem:[#allocation8 + $0x48] sm:$0xff]
        %v541 = vld [vmem:[#allocation8 + $0x50] sm:$0xff]
        %v542 = vld [vmem:[#allocation8 + $0x58] sm:$0xff]
        %v543 = vld [vmem:[#allocation8 + $0x60] sm:$0xff]
        %v544 = vld [vmem:[#allocation8 + $0x68] sm:$0xff]
        %v545 = vld [vmem:[#allocation8 + $0x70] sm:$0xff]
        %v546 = vld [vmem:[#allocation8 + $0x78] sm:$0xff]
        %v547 = vld [vmem:[%s7] sm:$0x1]
        %v549 = vperm.slane %v547, 0
        %551 = vmatpush.msra.mxu0 %v546
        %552 = vmatpush.msra.mxu0 %v545
        %553 = vmatpush.msra.mxu0 %v544
        %554 = vmatpush.msra.mxu0 %v543
        %555 = vmatpush.msra.mxu0 %v542
        %556 = vmatpush.msra.mxu0 %v541
        %557 = vmatpush.msra.mxu0 %v540
        %558 = vmatpush.msra.mxu0 %v539
        %559 = vmatpush.msra.mxu0 %v538
        %560 = vmatpush.msra.mxu0 %v537
        %561 = vmatpush.msra.mxu0 %v536
        %562 = vmatpush.msra.mxu0 %v535
        %563 = vmatpush.msra.mxu0 %v534
        %564 = vmatpush.msra.mxu0 %v533
        %565 = vmatpush.msra.mxu0 %v532
        %566 = vmatpush.msra.mxu0 %v531
        %567 = vmatmul.f32.gmra.mxu0 %v527
        %v568 = vpop.f32.mrf.mxu0
        %v569 = vadd.f32 %v549, %v568
        %570 = vmatmul.f32.gmra.mxu0 %v528
        %v571 = vpop.f32.mrf.mxu0
        %v572 = vadd.f32 %v549, %v571
        %573 = vmatmul.f32.gmra.mxu0 %v529
        %v574 = vpop.f32.mrf.mxu0
        %v575 = vadd.f32 %v549, %v574
        %576 = vmatmul.f32.gmra.mxu0 %v530
        %v577 = vpop.f32.mrf.mxu0
        %v578 = vadd.f32 %v549, %v577
        %579 = vdwg.mxu0
        %v580 = vmax.f32 %v569, 0.0
        %v581 = vmax.f32 %v572, 0.0
        %v582 = vmax.f32 %v575, 0.0
        %v583 = vmax.f32 %v578, 0.0
        %v584 = vld [vmem:[#allocation10] sm:$0xff]
        %v585 = vld [vmem:[#allocation10 + $0x8] sm:$0xff]
        %v586 = vld [vmem:[#allocation10 + $0x10] sm:$0xff]
        %v587 = vld [vmem:[#allocation10 + $0x18] sm:$0xff]
        %v588 = vld [vmem:[#allocation10 + $0x20] sm:$0xff]
        %v589 = vld [vmem:[#allocation10 + $0x28] sm:$0xff]
        %v590 = vld [vmem:[#allocation10 + $0x30] sm:$0xff]
        %v591 = vld [vmem:[#allocation10 + $0x38] sm:$0xff]
        %v592 = vld [vmem:[#allocation10 + $0x40] sm:$0xff]
        %v593 = vld [vmem:[#allocation10 + $0x48] sm:$0xff]
        %v594 = vld [vmem:[#allocation10 + $0x50] sm:$0xff]
        %v595 = vld [vmem:[#allocation10 + $0x58] sm:$0xff]
        %v596 = vld [vmem:[#allocation10 + $0x60] sm:$0xff]
        %v597 = vld [vmem:[#allocation10 + $0x68] sm:$0xff]
        %v598 = vld [vmem:[#allocation10 + $0x70] sm:$0xff]
        %v599 = vld [vmem:[#allocation10 + $0x78] sm:$0xff]
        %v600 = vld [vmem:[%s8] sm:$0x1]
        %v602 = vperm.slane %v600, 0
        %604 = vmatpush.msra.mxu0 %v599
        %605 = vmatpush.msra.mxu0 %v598
        %606 = vmatpush.msra.mxu0 %v597
        %607 = vmatpush.msra.mxu0 %v596
        %608 = vmatpush.msra.mxu0 %v595
        %609 = vmatpush.msra.mxu0 %v594
        %610 = vmatpush.msra.mxu0 %v593
        %611 = vmatpush.msra.mxu0 %v592
        %612 = vmatpush.msra.mxu0 %v591
        %613 = vmatpush.msra.mxu0 %v590
        %614 = vmatpush.msra.mxu0 %v589
        %615 = vmatpush.msra.mxu0 %v588
        %616 = vmatpush.msra.mxu0 %v587
        %617 = vmatpush.msra.mxu0 %v586
        %618 = vmatpush.msra.mxu0 %v585
        %619 = vmatpush.msra.mxu0 %v584
        %620 = vmatmul.f32.gmra.mxu0 %v580
        %v621 = vpop.f32.mrf.mxu0
        %v622 = vadd.f32 %v602, %v621
        %623 = vmatmul.f32.gmra.mxu0 %v581
        %v624 = vpop.f32.mrf.mxu0
        %v625 = vadd.f32 %v602, %v624
        %626 = vmatmul.f32.gmra.mxu0 %v582
        %v627 = vpop.f32.mrf.mxu0
        %v628 = vadd.f32 %v602, %v627
        %629 = vmatmul.f32.gmra.mxu0 %v583
        %v630 = vpop.f32.mrf.mxu0
        %v631 = vadd.f32 %v602, %v630
        %632 = vdwg.mxu0
        %v633 = vmax.f32 %v622, 0.0
        %v634 = vmax.f32 %v625, 0.0
        %v635 = vmax.f32 %v628, 0.0
        %v636 = vmax.f32 %v631, 0.0
        %637 = vst [vmem:[%s418] sm:$0xff] %v633
        %638 = vst [vmem:[%s418 + $0x8] sm:$0xff] %v634
        %639 = vst [vmem:[%s418 + $0x10] sm:$0xff] %v635
        %640 = vst [vmem:[%s418 + $0x18] sm:$0xff] %v636
        %s641 = sand.u32 %s230, 1
        %s642 = scalar_lea.sflag [#allocation4], %s641
        %s643 = sand.u32 %s230, 1
        %s644 = smul.addr %s643, 32
        %s645 = scalar_lea.vmem [#allocation11], %s644
        // Predicated region
        $region77: #{tpu_custom_call.1} parent=55 // pred_check
          %p646 = pneg %p240
        $region78: #{tpu_custom_call.1} parent=55 // pred_check_branch
          %648 = sbr.rel (%p646) target = $region80
        $region79: #{tpu_custom_call.1} parent=55 // pred_region
          %s649 = smul.u32 4, %s28
          %651 = vsyncadd %s642, 0
          %s652 = smul.addr %s649, 8
          %s653 = scalar_lea.hbm %s9, %s652
          %s654 = sshll.u32 %s645, 4
          %s655 = int_to_ptr.vmem [resolvable:$true] %s654
          %s656 = sshll.u32 %s653, 4
          %s657 = int_to_ptr.hbm [resolvable:$true] %s656
          %662 = dma.vmem_to_hbm [thread:$0]  %s655, 512, %s657, %s642, 128, 128, 8
        $region80: #{tpu_custom_call.1} parent=55 // pred_fallthru
          _
      $region56: #{tpu_custom_call.1} parent=5 // pred_fallthru
        _
      %p663 = scmp.le.s32.totalorder 2, %s23
      // Predicated region
      $region81: #{tpu_custom_call.1} parent=5 // pred_check
        %p664 = pneg %p663
      $region82: #{tpu_custom_call.1} parent=5 // pred_check_branch
        %666 = sbr.rel (%p664) target = $region84
      $region83: #{tpu_custom_call.1} parent=5 // pred_region
        %s667 = ssub.s32 %s23, 2
        // Predicated region
        $region85: #{tpu_custom_call.1} parent=83 // pred_check
          %p668 = pneg %p246
        $region86: #{tpu_custom_call.1} parent=83 // pred_check_branch
          %670 = sbr.rel (%p668) target = $region88
        $region87: #{tpu_custom_call.1} parent=83 // pred_region
          %s671 = sand.u32 %s231, 1
          %s672 = scalar_lea.sflag [#allocation4], %s671
          %s673 = sand.u32 %s231, 1
          %s674 = smul.addr %s673, 32
          %s675 = scalar_lea.vmem [#allocation11], %s674
          %677 = dma.done %s672, 512
        $region88: #{tpu_custom_call.1} parent=83 // pred_fallthru
          _
      $region84: #{tpu_custom_call.1} parent=5 // pred_fallthru
        _
    $region6: #{tpu_custom_call.1} parent=1 // loop_footer
      %s27 = sadd.s32 1, %s23
    $region7: #{tpu_custom_call.1} parent=1 // loop_footer_branch
      %22 = sbr.rel target = $region3
    $region8: #{tpu_custom_call.1} parent=1 // loop_exit
      _
    %678 = vsyncpa [#allocation3], 1
    %s679 = scalar_lea.sflag [#allocation3], 1
    %680 = vsyncpa %s679, 1
    %681 = vsyncpa [#allocation6], 1
    %682 = vsyncpa [#allocation9], 1
    %683 = vsyncpa [#allocation4], 1
    %s684 = scalar_lea.sflag [#allocation4], 1
    %685 = vsyncpa %s684, 1

</llo_original>
